<compile_context>
chip_gen: v5e
topology: v5e:2x2
jax: 0.10.0
libtpu: 0.0.40
codegen_flags: <defaults>
</compile_context>

<pallas_src>
import jax
import jax.numpy as jnp
from jax.experimental import pallas as pl
from jax.experimental.pallas import tpu as pltpu


_TARGET_BLOCK_BYTES = 4 * 1024 * 1024   # x block ~4 MiB -> ~8 MiB double-buffered
_VMEM_LIMIT_BYTES = 32 * 1024 * 1024    # safe on v5e/v6e (128 MiB) and v7x (64 MiB/TC)


def _round_up(x, m):
    return ((x + m - 1) // m) * m


def _choose_tb(B, F, itemsize):
    """Batch-tile rows from a byte budget (2-8 MiB per block per review)."""
    mult = max(8, 32 // itemsize)                 # 8 f32, 16 bf16, 32 int8/fp8
    row_bytes = max(1, F * itemsize)
    tb = max(mult, (_TARGET_BLOCK_BYTES // row_bytes) // mult * mult)
    tb = min(tb, _round_up(B, mult))              # never larger than the batch
    # Keep the grid >= ~8 steps (feeds both v7x TensorCores' pipelines) when
    # the batch is big enough that blocks stay a reasonable size.
    if pl.cdiv(B, tb) < 8 and B >= 8 * mult:
        tb = max(mult, _round_up(pl.cdiv(B, 8), mult))
    return tb


def _logreg_kernel(x_ref, w_ref, b_ref, o_ref):
    # x_ref: (tb, F)   w_ref: (1, F)   b_ref: (1,) f32 in SMEM   o_ref: (1, 1, tb)
    # z[0, j] = sum_f w[0, f] * x[j, f] == (x @ W.T)[j, 0]; MXU, f32 accumulate,
    # lane-dense (1, tb) result.
    z = jax.lax.dot_general(
        w_ref[...], x_ref[...],
        dimension_numbers=(((1,), (1,)), ((), ())),
        preferred_element_type=jnp.float32)                   # (1, tb)
    y = jax.nn.sigmoid(z + b_ref[0])
    o_ref[...] = y.reshape(o_ref.shape).astype(o_ref.dtype)


def logistic_regression(x, weight, bias, *, tb=None):
    """y = sigmoid(x @ weight.T + bias)   (PyTorch nn.Linear(F, 1) + sigmoid)

    x:      (B, F) — streamed to the kernel in its own dtype (no host cast/pad)
    weight: (1, F)
    bias:   (1,)
    returns (B, 1) float32
    """
    B, F = x.shape
    itemsize = jnp.dtype(x.dtype).itemsize
    if tb is None:
        tb = _choose_tb(B, F, itemsize)
    num_tiles = pl.cdiv(B, tb)

    w = weight.reshape(1, F).astype(x.dtype)      # match MXU operand dtype
    b = bias.reshape(1).astype(jnp.float32)       # scalar -> SMEM

    out = pl.pallas_call(
        _logreg_kernel,
        out_shape=jax.ShapeDtypeStruct((num_tiles, 1, tb), jnp.float32),
        grid_spec=pltpu.PrefetchScalarGridSpec(
            num_scalar_prefetch=0,
            grid=(num_tiles,),
            in_specs=[
                pl.BlockSpec((tb, F), lambda i: (i, 0)),      # x: batch-tiled
                pl.BlockSpec((1, F), lambda i: (0, 0)),       # w: resident
                pl.BlockSpec(memory_space=pltpu.SMEM),        # bias scalar
            ],
            out_specs=pl.BlockSpec((1, 1, tb), lambda i: (i, 0, 0)),
        ),
        compiler_params=pltpu.CompilerParams(
            dimension_semantics=("parallel",),
            vmem_limit_bytes=_VMEM_LIMIT_BYTES),
    )(x, w, b)

    # (num_tiles, 1, tb) -> (B, 1); trailing lanes of the last tile (the
    # out-of-range rows, if any) are dropped here.
    return out.reshape(num_tiles * tb)[:B].reshape(B, 1)


if __name__ == "__main__":
    key = jax.random.PRNGKey(0)
    kx, kw, kb, kx2 = jax.random.split(key, 4)

    B, F = 8, 32  # batch=8, n_input_features=32

    x = jax.random.normal(kx, (B, F), dtype=jnp.float32)
    # Deterministic init mimicking nn.Linear's U(-1/sqrt(F), 1/sqrt(F)).
    bound = 1.0 / jnp.sqrt(jnp.float32(F))
    weight = jax.random.uniform(kw, (1, F), minval=-bound, maxval=bound,
                                dtype=jnp.float32)
    bias = jax.random.uniform(kb, (1,), minval=-bound, maxval=bound,
                              dtype=jnp.float32)

    def ref(xv):
        return jax.nn.sigmoid(
            jnp.dot(xv, weight.T, precision=jax.lax.Precision.HIGHEST) + bias)

    # Single-tile path (auto tb).
    y = logistic_regression(x, weight, bias)
    jax.block_until_ready(y)
    assert y.shape == (B, 1)
    assert jnp.allclose(y, ref(x), atol=3e-3), "mismatch vs reference (single tile)"

    # Multi-tile + ragged-tail path: B=40, tb=16 -> grid of 3 tiles, the last
    # tile has 8 out-of-range rows dropped by the wrapper slice.
    B2 = 40
    x2 = jax.random.normal(kx2, (B2, F), dtype=jnp.float32)
    y2 = logistic_regression(x2, weight, bias, tb=16)
    jax.block_until_ready(y2)
    assert y2.shape == (B2, 1)
    assert jnp.allclose(y2, ref(x2), atol=3e-3), "mismatch vs reference (ragged tail)"

    print("KERNEL_OK")
</pallas_src>

<mosaic_0001>
module attributes {stable_mosaic.version = 11 : i64} {
  func.func @_logreg_kernel(%arg0: i32, %arg1: memref<8x32xf32, #tpu.memory_space<vmem>>, %arg2: memref<1x32xf32, #tpu.memory_space<vmem>>, %arg3: memref<1xf32, #tpu.memory_space<smem>>, %arg4: memref<1x1x8xf32, #tpu.memory_space<vmem>>) attributes {dimension_semantics = [#tpu.dimension_semantics<parallel>], iteration_bounds = array<i64: 1>, scalar_prefetch = 0 : i64, scratch_operands = 0 : i64, tpu.core_type = #tpu.core_type<tc>, window_params = [{transform_indices = @transform_0, window_bounds = array<i64: 8, 32>}, {pipeline_mode = #tpu.pipeline_mode<synchronous>, transform_indices = @transform_1, window_bounds = array<i64: 1, 32>}, {transform_indices = @transform_2, window_bounds = array<i64: 1>}, {transform_indices = @transform_3, window_bounds = array<i64: 1, 1, 8>}]} {
    %c0 = arith.constant 0 : index
    %c0_0 = arith.constant 0 : index
    %0 = vector.load %arg2[%c0, %c0_0] : memref<1x32xf32, #tpu.memory_space<vmem>>, vector<1x32xf32>
    %c0_1 = arith.constant 0 : index
    %c0_2 = arith.constant 0 : index
    %1 = vector.load %arg1[%c0_1, %c0_2] : memref<8x32xf32, #tpu.memory_space<vmem>>, vector<8x32xf32>
    %cst = arith.constant dense<0.000000e+00> : vector<1x8xf32>
    %2 = tpu.matmul %0, %1, %cst {dimension_numbers = #tpu.dot_dimension_numbers<[1], [1], [0], [0], [0, 0, 1, 0], [], []>} : vector<1x32xf32>, vector<8x32xf32>, vector<1x8xf32> -> vector<1x8xf32>
    %c0_3 = arith.constant 0 : index
    %3 = memref.load %arg3[%c0_3] : memref<1xf32, #tpu.memory_space<smem>>
    %4 = vector.broadcast %3 : f32 to vector<1x8xf32>
    %5 = arith.addf %2, %4 : vector<1x8xf32>
    %6 = arith.negf %5 : vector<1x8xf32>
    %7 = math.exp %6 : vector<1x8xf32>
    %cst_4 = arith.constant 1.000000e+00 : f32
    %8 = vector.broadcast %cst_4 : f32 to vector<1x8xf32>
    %9 = arith.addf %8, %7 : vector<1x8xf32>
    %10 = arith.divf %8, %9 : vector<1x8xf32>
    %11 = vector.shape_cast %10 : vector<1x8xf32> to vector<1x1x8xf32>
    %c0_5 = arith.constant 0 : index
    %c0_6 = arith.constant 0 : index
    %c0_7 = arith.constant 0 : index
    %12 = vector.load %arg4[%c0_5, %c0_6, %c0_7] : memref<1x1x8xf32, #tpu.memory_space<vmem>>, vector<1x1x8xf32>
    tpu.vector_store %arg4[%c0_5, %c0_6, %c0_7], %11 {strides = array<i32>} : memref<1x1x8xf32, #tpu.memory_space<vmem>>, vector<1x1x8xf32>,
    return
  }
  func.func @transform_0(%arg0: i32) -> (i32, i32) {
    %c0_i32 = arith.constant 0 : i32
    %c0_i32_0 = arith.constant 0 : i32
    return %arg0, %c0_i32 : i32, i32
  }
  func.func @transform_1(%arg0: i32) -> (i32, i32) {
    %c0_i32 = arith.constant 0 : i32
    %c0_i32_0 = arith.constant 0 : i32
    %c0_i32_1 = arith.constant 0 : i32
    return %c0_i32, %c0_i32_0 : i32, i32
  }
  func.func @transform_2(%arg0: i32) -> i32 {
    %c0_i32 = arith.constant 0 : i32
    %c0_i32_0 = arith.constant 0 : i32
    return %c0_i32 : i32
  }
  func.func @transform_3(%arg0: i32) -> (i32, i32, i32) {
    %c0_i32 = arith.constant 0 : i32
    %c0_i32_0 = arith.constant 0 : i32
    %c0_i32_1 = arith.constant 0 : i32
    return %arg0, %c0_i32, %c0_i32_0 : i32, i32, i32
  }
}

</mosaic_0001>

<llo_original>
// kernel: tpu_custom_call.1
$region0: #{tpu_custom_call.1}
  #allocation0 [shape = 'u32[]', space=smem, size = 0x4, offset = 0x4, fixed_abs, tag = 'smem constant byte address 0x4 - core index']
  #allocation1 [shape = 'u32[72,128]{1,0:T(1,128)}', space=vmem, size = 0x9000, scoped, tag = 'internal scratch']
  #allocation2 [shape = 'f32[1]{0:T(128)S(6)}', space=smem, size = 0x200, scoped, tag = 'scoped memory for tpu_custom_call.1']
  %s0 = inlined_call_operand.hbm [shape: f32[8,32], index: 0, kind: input, shape index: {}]
  %s1 = inlined_call_operand.vmem [shape: f32[1,32], index: 1, kind: input, shape index: {}]
  %s2 = inlined_call_operand.<no memory space> [shape: f32[1], index: 2, kind: input, shape index: {}]
  %s3 = inlined_call_operand.hbm [shape: f32[1,1,8], index: 3, kind: output, shape index: {}]
  %s4 = sld [smem:[#allocation0]]
  $region26: #{tpu_custom_call.1} parent=0
    _
  %s6 = ssub.s32 1, %s4
  %s7 = scalar_select 0, %s6, %s4
  %8 = sst [smem:[#allocation2]] %s2
  $region1: #{tpu_custom_call.1} parent=0
    #allocation3 [shape = 'u8[4096]{0}', space=vmem, size = 0x1000, scoped, tag = 'input window, operand 0, single buffered']
    #allocation4 [shape = 's32[1]{0}', space=sflag, size = 0x4, scoped, tag = 'scoped memory for tpu_custom_call.1']
    #allocation5 [shape = 's32[1]{0}', space=sflag, size = 0x4, scoped, tag = 'scoped memory for tpu_custom_call.1']
    #allocation6 [shape = 'u8[512]{0}', space=vmem, size = 0x400, scoped, tag = 'output window, operand 0, single buffered']
    %9 = vsyncpa [#allocation4], 0
    %10 = vsyncpa [#allocation5], 0
    // Predicated region
    $region2: #{tpu_custom_call.1} parent=1 // pred_check
      _
    $region3: #{tpu_custom_call.1} parent=1 // pred_check_branch
      %12 = sbr.rel (0) target = $region5
    $region4: #{tpu_custom_call.1} parent=1 // pred_region
      %14 = vsyncadd [#allocation4], 0
      %s16 = sshll.u32 %s0, 4
      %s17 = int_to_ptr.hbm [resolvable:$true] %s16
      %s18 = sshll.u32 [#allocation3], 4
      %s19 = int_to_ptr.vmem [resolvable:$true] %s18
      %21 = dma.hbm_to_vmem [thread:$0]  %s17, 128, %s19, [#allocation4]
    $region5: #{tpu_custom_call.1} parent=1 // pred_fallthru
      _
    // Predicated region
    $region6: #{tpu_custom_call.1} parent=1 // pred_check
      _
    $region7: #{tpu_custom_call.1} parent=1 // pred_check_branch
      %23 = sbr.rel (0) target = $region9
    $region8: #{tpu_custom_call.1} parent=1 // pred_region
      _
    $region9: #{tpu_custom_call.1} parent=1 // pred_fallthru
      _
    // Predicated region
    $region10: #{tpu_custom_call.1} parent=1 // pred_check
      _
    $region11: #{tpu_custom_call.1} parent=1 // pred_check_branch
      %25 = sbr.rel (0) target = $region13
    $region12: #{tpu_custom_call.1} parent=1 // pred_region
      _
    $region13: #{tpu_custom_call.1} parent=1 // pred_fallthru
      _
    // Predicated region
    $region14: #{tpu_custom_call.1} parent=1 // pred_check
      _
    $region15: #{tpu_custom_call.1} parent=1 // pred_check_branch
      %27 = sbr.rel (0) target = $region17
    $region16: #{tpu_custom_call.1} parent=1 // pred_region
      %29 = dma.done [#allocation4], 128
    $region17: #{tpu_custom_call.1} parent=1 // pred_fallthru
      _
    %v30 = vld [vmem:[%s1] sm:$0x1]
    %v31 = vld [vmem:[#allocation3] sm:$0xff]
    %s32 = sld [smem:[#allocation2]]
    %v33 = vstv %s32
    %vm34 = vcmask 261120
    %v36 = vsel %vm34, %v30, 0
    %v39 = vsel %vm34, %v31, 0
    %41 = vmatpush.xpose.msra.mxu0 0.0
    %42 = vmatpush.xpose.msra.mxu0 0.0
    %43 = vmatpush.xpose.msra.mxu0 0.0
    %44 = vmatpush.xpose.msra.mxu0 0.0
    %45 = vmatpush.xpose.msra.mxu0 0.0
    %46 = vmatpush.xpose.msra.mxu0 0.0
    %47 = vmatpush.xpose.msra.mxu0 0.0
    %48 = vmatpush.xpose.msra.mxu0 0.0
    %49 = vmatpush.xpose.msra.mxu0 0.0
    %50 = vmatpush.xpose.msra.mxu0 0.0
    %51 = vmatpush.xpose.msra.mxu0 0.0
    %52 = vmatpush.xpose.msra.mxu0 0.0
    %53 = vmatpush.xpose.msra.mxu0 0.0
    %54 = vmatpush.xpose.msra.mxu0 0.0
    %55 = vmatpush.xpose.msra.mxu0 0.0
    %56 = vmatpush.xpose.msra.mxu0 %v39
    %57 = vmatmul.f32.gmra.mxu0 %v36
    %v58 = vpop.f32.mrf.mxu0
    %v59 = vadd.f32 %v33, %v58
    %60 = vdwg.mxu0
    %v61 = vxor.u32 %v59, 2147483648
    %v62 = vmul.f32 %v61, 1.442695
    %v63 = vpow.pop %v62
    %v64 = vadd.f32 %v63, 1.0
    %v65 = vrcp.pop %v64
    %v66 = vmul.f32 %v64, %v65
    %v67 = vsub.f32 1.0, %v66
    %v68 = vmul.f32 %v65, %v67
    %v69 = vadd.f32 %v65, %v68
    %vm70 = vweird.f32 %v64
    %vm71 = vweird.f32 %v65
    %vm72 = vmor %vm70, %vm71
    %v73 = vsel %vm72, %v65, %v69
    %v74 = vand.u32 2147483647, %v64
    %vm75 = vcmp.eq.f32.partialorder %v74, 8.507059e+37
    %v76 = vand.u32 %v64, 2147483648
    %v77 = vor.u32 1.1754944e-38, %v76
    %v78 = vsel %vm75, %v77, %v73
    %v79 = vmul.f32 1.0, %v78
    %vm80 = vcmask 57344
    %81 = vst.msk [vmem:[#allocation6] sm:$0x1] %vm80, %v79
    // Predicated region
    $region18: #{tpu_custom_call.1} parent=1 // pred_check
      _
    $region19: #{tpu_custom_call.1} parent=1 // pred_check_branch
      %83 = sbr.rel (0) target = $region21
    $region20: #{tpu_custom_call.1} parent=1 // pred_region
      %85 = vsyncadd [#allocation5], 0
      %s87 = sshll.u32 [#allocation6], 4
      %s88 = int_to_ptr.vmem [resolvable:$true] %s87
      %s89 = sshll.u32 %s3, 4
      %s90 = int_to_ptr.hbm [resolvable:$true] %s89
      %92 = dma.vmem_to_hbm [thread:$0]  %s88, 16, %s90, [#allocation5]
    $region21: #{tpu_custom_call.1} parent=1 // pred_fallthru
      _
    // Predicated region
    $region22: #{tpu_custom_call.1} parent=1 // pred_check
      _
    $region23: #{tpu_custom_call.1} parent=1 // pred_check_branch
      %94 = sbr.rel (0) target = $region25
    $region24: #{tpu_custom_call.1} parent=1 // pred_region
      %96 = dma.done [#allocation5], 16
    $region25: #{tpu_custom_call.1} parent=1 // pred_fallthru
      _
    %97 = vsyncpa [#allocation4], 1
    %98 = vsyncpa [#allocation5], 1

</llo_original>
